<compile_context>
chip_gen: v7x
topology: tpu7x:2x2x1
jax: 0.10.0
libtpu: 0.0.40
codegen_flags: <defaults>
</compile_context>

<pallas_src>
import functools

import numpy as np
import jax
import jax.numpy as jnp
from jax import lax
from jax.experimental import pallas as pl
from jax.experimental.pallas import tpu as pltpu

EPS = 1e-5      # nn.InstanceNorm2d default eps (affine=False, no running stats)
SLOPE = 0.2     # LeakyReLU negative slope


# ----------------------------- kernel helpers ------------------------------ #
def _instance_norm_rows(a, eps=EPS):
    # a: (C, P) -- per-channel (per-row) normalization over the spatial lanes,
    # biased variance (matches torch InstanceNorm2d).  Centered tile is reused.
    mean = jnp.mean(a, axis=1, keepdims=True)
    c = a - mean
    var = jnp.mean(c * c, axis=1, keepdims=True)
    return c * lax.rsqrt(var + eps)


def _leaky_relu(a, slope=SLOPE):
    return jnp.where(a > 0, a, slope * a)


# ------------------------------ fused kernel ------------------------------- #
def _upblock_kernel(x_ref, y_ref, awrep_ref, ah_ref, wup_ref, wmg_ref, wcv_ref,
                    mask_ref, out_ref, *, cin, w2):
    nb, F, P = out_ref.shape

    # Constants: loaded / broadcast ONCE per grid step (hoisted out of the
    # per-sample loop -- review: no repeated broadcasts inside unrolled loops).
    awrep = awrep_ref[...]                                     # (W,  P)
    ah_full = jnp.concatenate([ah_ref[...]] * cin, axis=0)     # (Cin*H, P)
    wup = wup_ref[...]                                         # (F, Cin*H)
    wmg = wmg_ref[...]                                         # (F, F)
    wcv = wcv_ref[...]                                         # (F, 9F)
    mask = mask_ref[...]                                       # (9F, P) host-built

    offs = [dy * w2 + dx for dy in (-1, 0, 1) for dx in (-1, 0, 1)]

    # Unrolled loop over the samples in this block; the LLO scheduler can
    # interleave MXU work of one sample under VPU/XLU work of another.
    for i in range(nb):
        # --- bilinear upsample (lane-dense, separable constants) + 1x1 "up" conv
        # xbig[c*H+h, oh*W2+ow] = sum_w A_w[ow,w] * x[c,h,w]
        xbig = jnp.dot(x_ref[i], awrep, preferred_element_type=jnp.float32)
        # x1[f, p] = sum_{c,h} w_up[f,c] * A_h[oh,h] * xbig[c*H+h, p]
        x1 = jnp.dot(wup, ah_full * xbig, preferred_element_type=jnp.float32)
        x1 = _instance_norm_rows(x1)        # bias dropped: IN cancels it exactly

        # --- skip add; merge 1x1 conv + InstanceNorm + LeakyReLU
        z = jnp.dot(wmg, x1 + y_ref[i], preferred_element_type=jnp.float32)
        z = _leaky_relu(_instance_norm_rows(z))

        # --- 3x3 conv (padding=1): in-VMEM im2col = 9 lane-rolled taps of z,
        #     out-of-image taps zeroed by ONE multiply with the precomputed mask.
        taps = [z if d == 0 else pltpu.roll(z, shift=(-d) % P, axis=1)
                for d in offs]
        tcat = jnp.concatenate(taps, axis=0) * mask            # (9F, P)
        c = jnp.dot(wcv, tcat, preferred_element_type=jnp.float32)
        c = _instance_norm_rows(c)

        # --- residual LeakyReLU (lane-dense unmasked store: P % 128 == 0)
        out_ref[i] = _leaky_relu(c + z)


# --------------------------------- glue ------------------------------------ #
def bilinear_matrix(n_in, n_out):
    # UpsamplingBilinear2d uses align_corners=True
    A = np.zeros((n_out, n_in), dtype=np.float32)
    if n_in == 1:
        A[:, 0] = 1.0
        return A
    src = np.arange(n_out) * (n_in - 1) / (n_out - 1)
    lo = np.clip(np.floor(src).astype(np.int64), 0, n_in - 2)
    frac = (src - lo).astype(np.float32)
    A[np.arange(n_out), lo] = 1.0 - frac
    A[np.arange(n_out), lo + 1] += frac
    return A


def make_tap_mask(F, H2, W2):
    # mask[t*F + f, oh*W2 + ow] = 1 iff the 3x3 tap t=(dy+1)*3+(dx+1) at (oh, ow)
    # falls inside the H2 x W2 image (zero-padding semantics).
    P = H2 * W2
    rows = np.arange(P) // W2
    cols = np.arange(P) % W2
    blocks = []
    for dy in (-1, 0, 1):
        for dx in (-1, 0, 1):
            ok = ((rows + dy >= 0) & (rows + dy < H2) &
                  (cols + dx >= 0) & (cols + dx < W2)).astype(np.float32)
            blocks.append(np.broadcast_to(ok, (F, P)))
    return jnp.asarray(np.concatenate(blocks, axis=0))          # (9F, P)


def make_kernel_params(w_up_t, w_mg_t, w_cv_t, H, W):
    # Kernel-layout parameters (channels-major, left-multiplying weights).
    # Conv biases are intentionally omitted: conv -> InstanceNorm(affine=False)
    # cancels a per-channel constant exactly.
    F, Cin = int(w_up_t.shape[0]), int(w_up_t.shape[1])
    H2, W2 = 2 * H, 2 * W
    A_h = bilinear_matrix(H, H2)                         # (H2, H)
    A_w = bilinear_matrix(W, W2)                         # (W2, W)
    aw_rep = np.tile(A_w.T, (1, H2))                     # (W, P): [w, oh*W2+ow] = A_w[ow, w]
    ah_mat = np.repeat(A_h.T, W2, axis=1)                # (H, P): [h, oh*W2+ow] = A_h[oh, h]
    w_up2 = np.asarray(w_up_t[:, :, 0, 0])               # (F, Cin)
    w_up_x = np.repeat(w_up2, H, axis=1)                 # (F, Cin*H): [f, c*H+h] = w_up[f, c]
    return {
        "aw_rep": jnp.asarray(aw_rep, jnp.float32),
        "ah_mat": jnp.asarray(ah_mat, jnp.float32),
        "w_up_x": jnp.asarray(w_up_x, jnp.float32),
        "w_mg": jnp.asarray(w_mg_t[:, :, 0, 0], jnp.float32),
        "w_conv": jnp.transpose(w_cv_t, (0, 2, 3, 1)).reshape(F, 9 * F),
        "tap_mask": make_tap_mask(F, H2, W2),
    }


def _samples_per_step(n, max_per_step=4):
    # Batch samples per grid step to amortize the ~0.35 us/step overhead, but
    # keep >=2 grid blocks when possible so both v7x TensorCores get work.
    # max_per_step is kept small to bound vreg live ranges of the unrolled loop.
    target = max(1, min(max_per_step, n // 2)) if n > 1 else 1
    for nb in range(target, 0, -1):
        if n % nb == 0:
            return nb
    return 1


def upblock_pallas(x, y, params, *, samples_per_step=None):
    N, Cin, H, W = x.shape
    F = params["w_mg"].shape[0]
    H2, W2 = 2 * H, 2 * W
    P = H2 * W2
    assert y.shape == (N, F, H2, W2)
    # Lane-dense output stores (unmasked vst) are the biggest single lever.
    # TODO(synk): pad P to a multiple of 128 instead of asserting for odd shapes.
    assert P % 128 == 0, "H2*W2 must be a multiple of 128 for lane-dense stores"

    nb = samples_per_step or _samples_per_step(N)
    assert N % nb == 0

    x_flat = x.reshape(N, Cin * H, W)        # contiguous reshape, no copy
    y_flat = y.reshape(N, F, P)              # contiguous reshape, no copy

    kernel = functools.partial(_upblock_kernel, cin=Cin, w2=W2)
    out = pl.pallas_call(
        kernel,
        out_shape=jax.ShapeDtypeStruct((N, F, P), jnp.float32),
        grid=(N // nb,),
        in_specs=[
            pl.BlockSpec((nb, Cin * H, W), lambda n: (n, 0, 0)),   # x   (nb samples)
            pl.BlockSpec((nb, F, P), lambda n: (n, 0, 0)),         # y   (nb samples)
            # Constant blocks (~30 KB total): double-buffering them is negligible.
            # If they grow (large H*W), mark with pipeline_mode=pl.Buffered(1) or
            # DMA once into scratch.
            pl.BlockSpec((W, P), lambda n: (0, 0)),                # A_w replicated
            pl.BlockSpec((H, P), lambda n: (0, 0)),                # A_h lane weights
            pl.BlockSpec((F, Cin * H), lambda n: (0, 0)),          # w_up expanded
            pl.BlockSpec((F, F), lambda n: (0, 0)),                # w_mg
            pl.BlockSpec((F, 9 * F), lambda n: (0, 0)),            # w_conv (3x3)
            pl.BlockSpec((9 * F, P), lambda n: (0, 0)),            # 3x3 edge masks
        ],
        out_specs=pl.BlockSpec((nb, F, P), lambda n: (n, 0, 0)),
        compiler_params=pltpu.CompilerParams(dimension_semantics=("parallel",)),
    )(x_flat, y_flat, params["aw_rep"], params["ah_mat"], params["w_up_x"],
      params["w_mg"], params["w_conv"], params["tap_mask"])

    return out.reshape(N, F, H2, W2)         # already NCHW-flat; free reshape


# ------------------------ pure-JAX reference (NCHW) ------------------------- #
def ref_upblock(x, y, tp):
    def conv(v, w, b, pad):
        o = lax.conv_general_dilated(v, w, (1, 1), [(pad, pad), (pad, pad)],
                                     precision="highest")
        return o + b[None, :, None, None]

    def inorm(v):
        m = v.mean(axis=(2, 3), keepdims=True)
        var = jnp.square(v - m).mean(axis=(2, 3), keepdims=True)
        return (v - m) / jnp.sqrt(var + EPS)

    def lrelu(v):
        return jnp.where(v > 0, v, SLOPE * v)

    N, Cin, H, W = x.shape
    A_h = bilinear_matrix(H, 2 * H)
    A_w = bilinear_matrix(W, 2 * W)
    xu = jnp.einsum("oh,nchw,pw->ncop", A_h, x, A_w, precision="highest")
    xup = inorm(conv(xu, tp["w_up"], tp["b_up"], 0))
    z = xup + y
    z = lrelu(inorm(conv(z, tp["w_mg"], tp["b_mg"], 0)))
    out = inorm(conv(z, tp["w_conv"], tp["b_conv"], 1))
    return lrelu(out + z)


# ----------------------------------- main ----------------------------------- #
if __name__ == "__main__":
    N, Cin, F, H, W = 2, 4, 8, 8, 8        # y must be (N, F, 2H, 2W)

    key = jax.random.PRNGKey(0)
    ks = jax.random.split(key, 8)

    # deterministic synthetic parameters (PyTorch layouts, biases included)
    w_up_t = 0.1 * jax.random.normal(ks[0], (F, Cin, 1, 1), jnp.float32)
    b_up_t = 0.1 * jax.random.normal(ks[1], (F,), jnp.float32)
    w_mg_t = 0.1 * jax.random.normal(ks[2], (F, F, 1, 1), jnp.float32)
    b_mg_t = 0.1 * jax.random.normal(ks[3], (F,), jnp.float32)
    w_cv_t = 0.1 * jax.random.normal(ks[4], (F, F, 3, 3), jnp.float32)
    b_cv_t = 0.1 * jax.random.normal(ks[5], (F,), jnp.float32)

    x = jax.random.normal(ks[6], (N, Cin, H, W), jnp.float32)
    y = jax.random.normal(ks[7], (N, F, 2 * H, 2 * W), jnp.float32)

    params = make_kernel_params(w_up_t, w_mg_t, w_cv_t, H, W)   # biases dropped (IN cancels them)
    torch_params = {
        "w_up": w_up_t, "b_up": b_up_t,
        "w_mg": w_mg_t, "b_mg": b_mg_t,
        "w_conv": w_cv_t, "b_conv": b_cv_t,
    }

    out = jax.jit(upblock_pallas)(x, y, params)
    out = jax.block_until_ready(out)

    ref = jax.block_until_ready(ref_upblock(x, y, torch_params))
    assert out.shape == (N, F, 2 * H, 2 * W)
    np.testing.assert_allclose(np.asarray(out), np.asarray(ref), rtol=1e-4, atol=1e-4)

    print("KERNEL_OK")
</pallas_src>

<mosaic_0001>
module attributes {stable_mosaic.version = 11 : i64} {
  func.func @_upblock_kernel(%arg0: i32, %arg1: memref<1x32x8xf32, #tpu.memory_space<vmem>>, %arg2: memref<1x8x256xf32, #tpu.memory_space<vmem>>, %arg3: memref<8x256xf32, #tpu.memory_space<vmem>>, %arg4: memref<8x256xf32, #tpu.memory_space<vmem>>, %arg5: memref<8x32xf32, #tpu.memory_space<vmem>>, %arg6: memref<8x8xf32, #tpu.memory_space<vmem>>, %arg7: memref<8x72xf32, #tpu.memory_space<vmem>>, %arg8: memref<72x256xf32, #tpu.memory_space<vmem>>, %arg9: memref<1x8x256xf32, #tpu.memory_space<vmem>>) attributes {dimension_semantics = [#tpu.dimension_semantics<parallel>], iteration_bounds = array<i64: 2>, scalar_prefetch = 0 : i64, scratch_operands = 0 : i64, tpu.core_type = #tpu.core_type<tc>, window_params = [{transform_indices = @transform_0, window_bounds = array<i64: 1, 32, 8>}, {transform_indices = @transform_1, window_bounds = array<i64: 1, 8, 256>}, {pipeline_mode = #tpu.pipeline_mode<synchronous>, transform_indices = @transform_2, window_bounds = array<i64: 8, 256>}, {pipeline_mode = #tpu.pipeline_mode<synchronous>, transform_indices = @transform_3, window_bounds = array<i64: 8, 256>}, {pipeline_mode = #tpu.pipeline_mode<synchronous>, transform_indices = @transform_4, window_bounds = array<i64: 8, 32>}, {pipeline_mode = #tpu.pipeline_mode<synchronous>, transform_indices = @transform_5, window_bounds = array<i64: 8, 8>}, {pipeline_mode = #tpu.pipeline_mode<synchronous>, transform_indices = @transform_6, window_bounds = array<i64: 8, 72>}, {pipeline_mode = #tpu.pipeline_mode<synchronous>, transform_indices = @transform_7, window_bounds = array<i64: 72, 256>}, {transform_indices = @transform_8, window_bounds = array<i64: 1, 8, 256>}]} {
    %c0 = arith.constant 0 : index
    %c0_0 = arith.constant 0 : index
    %0 = vector.load %arg3[%c0, %c0_0] : memref<8x256xf32, #tpu.memory_space<vmem>>, vector<8x256xf32>
    %c0_1 = arith.constant 0 : index
    %c0_2 = arith.constant 0 : index
    %1 = vector.load %arg4[%c0_1, %c0_2] : memref<8x256xf32, #tpu.memory_space<vmem>>, vector<8x256xf32>
    %2 = tpu.concatenate %1, %1, %1, %1 in 0 : vector<8x256xf32>, vector<8x256xf32>, vector<8x256xf32>, vector<8x256xf32> -> vector<32x256xf32>
    %c0_3 = arith.constant 0 : index
    %c0_4 = arith.constant 0 : index
    %3 = vector.load %arg5[%c0_3, %c0_4] : memref<8x32xf32, #tpu.memory_space<vmem>>, vector<8x32xf32>
    %c0_5 = arith.constant 0 : index
    %c0_6 = arith.constant 0 : index
    %4 = vector.load %arg6[%c0_5, %c0_6] : memref<8x8xf32, #tpu.memory_space<vmem>>, vector<8x8xf32>
    %c0_7 = arith.constant 0 : index
    %c0_8 = arith.constant 0 : index
    %5 = vector.load %arg7[%c0_7, %c0_8] : memref<8x72xf32, #tpu.memory_space<vmem>>, vector<8x72xf32>
    %c0_9 = arith.constant 0 : index
    %c0_10 = arith.constant 0 : index
    %6 = vector.load %arg8[%c0_9, %c0_10] : memref<72x256xf32, #tpu.memory_space<vmem>>, vector<72x256xf32>
    %c0_11 = arith.constant 0 : index
    %c0_12 = arith.constant 0 : index
    %c0_13 = arith.constant 0 : index
    %7 = vector.load %arg1[%c0_11, %c0_12, %c0_13] : memref<1x32x8xf32, #tpu.memory_space<vmem>>, vector<1x32x8xf32>
    %8 = vector.shape_cast %7 : vector<1x32x8xf32> to vector<32x8xf32>
    %cst = arith.constant dense<0.000000e+00> : vector<32x256xf32>
    %9 = tpu.matmul %8, %0, %cst {dimension_numbers = #tpu.dot_dimension_numbers<[1], [0], [0], [1], [0, 0, 1, 1], [], []>} : vector<32x8xf32>, vector<8x256xf32>, vector<32x256xf32> -> vector<32x256xf32>
    %10 = arith.mulf %2, %9 : vector<32x256xf32>
    %cst_14 = arith.constant dense<0.000000e+00> : vector<8x256xf32>
    %11 = tpu.matmul %3, %10, %cst_14 {dimension_numbers = #tpu.dot_dimension_numbers<[1], [0], [0], [1], [0, 0, 1, 1], [], []>} : vector<8x32xf32>, vector<32x256xf32>, vector<8x256xf32> -> vector<8x256xf32>
    %cst_15 = arith.constant dense<0.000000e+00> : vector<8xf32>
    %12 = vector.multi_reduction <add>, %11, %cst_15 [1] : vector<8x256xf32> to vector<8xf32>
    %13 = vector.shape_cast %12 : vector<8xf32> to vector<8x1xf32>
    %cst_16 = arith.constant 2.560000e+02 : f32
    %14 = vector.broadcast %cst_16 : f32 to vector<8x1xf32>
    %15 = arith.divf %13, %14 : vector<8x1xf32>
    %16 = vector.broadcast %15 : vector<8x1xf32> to vector<8x256xf32>
    %17 = arith.subf %11, %16 : vector<8x256xf32>
    %18 = arith.mulf %17, %17 : vector<8x256xf32>
    %cst_17 = arith.constant dense<0.000000e+00> : vector<8xf32>
    %19 = vector.multi_reduction <add>, %18, %cst_17 [1] : vector<8x256xf32> to vector<8xf32>
    %20 = vector.shape_cast %19 : vector<8xf32> to vector<8x1xf32>
    %cst_18 = arith.constant 2.560000e+02 : f32
    %21 = vector.broadcast %cst_18 : f32 to vector<8x1xf32>
    %22 = arith.divf %20, %21 : vector<8x1xf32>
    %cst_19 = arith.constant 9.99999974E-6 : f32
    %23 = vector.broadcast %cst_19 : f32 to vector<8x1xf32>
    %24 = arith.addf %22, %23 : vector<8x1xf32>
    %25 = math.rsqrt %24 : vector<8x1xf32>
    %26 = vector.broadcast %25 : vector<8x1xf32> to vector<8x256xf32>
    %27 = arith.mulf %17, %26 : vector<8x256xf32>
    %c0_20 = arith.constant 0 : index
    %c0_21 = arith.constant 0 : index
    %c0_22 = arith.constant 0 : index
    %28 = vector.load %arg2[%c0_20, %c0_21, %c0_22] : memref<1x8x256xf32, #tpu.memory_space<vmem>>, vector<1x8x256xf32>
    %29 = vector.shape_cast %28 : vector<1x8x256xf32> to vector<8x256xf32>
    %30 = arith.addf %27, %29 : vector<8x256xf32>
    %cst_23 = arith.constant dense<0.000000e+00> : vector<8x256xf32>
    %31 = tpu.matmul %4, %30, %cst_23 {dimension_numbers = #tpu.dot_dimension_numbers<[1], [0], [0], [1], [0, 0, 1, 1], [], []>} : vector<8x8xf32>, vector<8x256xf32>, vector<8x256xf32> -> vector<8x256xf32>
    %cst_24 = arith.constant dense<0.000000e+00> : vector<8xf32>
    %32 = vector.multi_reduction <add>, %31, %cst_24 [1] : vector<8x256xf32> to vector<8xf32>
    %33 = vector.shape_cast %32 : vector<8xf32> to vector<8x1xf32>
    %cst_25 = arith.constant 2.560000e+02 : f32
    %34 = vector.broadcast %cst_25 : f32 to vector<8x1xf32>
    %35 = arith.divf %33, %34 : vector<8x1xf32>
    %36 = vector.broadcast %35 : vector<8x1xf32> to vector<8x256xf32>
    %37 = arith.subf %31, %36 : vector<8x256xf32>
    %38 = arith.mulf %37, %37 : vector<8x256xf32>
    %cst_26 = arith.constant dense<0.000000e+00> : vector<8xf32>
    %39 = vector.multi_reduction <add>, %38, %cst_26 [1] : vector<8x256xf32> to vector<8xf32>
    %40 = vector.shape_cast %39 : vector<8xf32> to vector<8x1xf32>
    %cst_27 = arith.constant 2.560000e+02 : f32
    %41 = vector.broadcast %cst_27 : f32 to vector<8x1xf32>
    %42 = arith.divf %40, %41 : vector<8x1xf32>
    %cst_28 = arith.constant 9.99999974E-6 : f32
    %43 = vector.broadcast %cst_28 : f32 to vector<8x1xf32>
    %44 = arith.addf %42, %43 : vector<8x1xf32>
    %45 = math.rsqrt %44 : vector<8x1xf32>
    %46 = vector.broadcast %45 : vector<8x1xf32> to vector<8x256xf32>
    %47 = arith.mulf %37, %46 : vector<8x256xf32>
    %cst_29 = arith.constant 0.000000e+00 : f32
    %48 = vector.broadcast %cst_29 : f32 to vector<8x256xf32>
    %49 = arith.cmpf ogt, %47, %48 : vector<8x256xf32>
    %cst_30 = arith.constant 2.000000e-01 : f32
    %50 = vector.broadcast %cst_30 : f32 to vector<8x256xf32>
    %51 = arith.mulf %50, %47 : vector<8x256xf32>
    %52 = arith.select %49, %47, %51 : vector<8x256xi1>, vector<8x256xf32>
    %c17_i32 = arith.constant 17 : i32
    %53 = tpu.dynamic_rotate %52 by %c17_i32 dim 1 : vector<8x256xf32>, i32 -> vector<8x256xf32>
    %c16_i32 = arith.constant 16 : i32
    %54 = tpu.dynamic_rotate %52 by %c16_i32 dim 1 : vector<8x256xf32>, i32 -> vector<8x256xf32>
    %c15_i32 = arith.constant 15 : i32
    %55 = tpu.dynamic_rotate %52 by %c15_i32 dim 1 : vector<8x256xf32>, i32 -> vector<8x256xf32>
    %c1_i32 = arith.constant 1 : i32
    %56 = tpu.dynamic_rotate %52 by %c1_i32 dim 1 : vector<8x256xf32>, i32 -> vector<8x256xf32>
    %c255_i32 = arith.constant 255 : i32
    %57 = tpu.dynamic_rotate %52 by %c255_i32 dim 1 : vector<8x256xf32>, i32 -> vector<8x256xf32>
    %c241_i32 = arith.constant 241 : i32
    %58 = tpu.dynamic_rotate %52 by %c241_i32 dim 1 : vector<8x256xf32>, i32 -> vector<8x256xf32>
    %c240_i32 = arith.constant 240 : i32
    %59 = tpu.dynamic_rotate %52 by %c240_i32 dim 1 : vector<8x256xf32>, i32 -> vector<8x256xf32>
    %c239_i32 = arith.constant 239 : i32
    %60 = tpu.dynamic_rotate %52 by %c239_i32 dim 1 : vector<8x256xf32>, i32 -> vector<8x256xf32>
    %61 = tpu.concatenate %53, %54, %55, %56, %52, %57, %58, %59, %60 in 0 : vector<8x256xf32>, vector<8x256xf32>, vector<8x256xf32>, vector<8x256xf32>, vector<8x256xf32>, vector<8x256xf32>, vector<8x256xf32>, vector<8x256xf32>, vector<8x256xf32> -> vector<72x256xf32>
    %62 = arith.mulf %61, %6 : vector<72x256xf32>
    %cst_31 = arith.constant dense<0.000000e+00> : vector<8x256xf32>
    %63 = tpu.matmul %5, %62, %cst_31 {dimension_numbers = #tpu.dot_dimension_numbers<[1], [0], [0], [1], [0, 0, 1, 1], [], []>} : vector<8x72xf32>, vector<72x256xf32>, vector<8x256xf32> -> vector<8x256xf32>
    %cst_32 = arith.constant dense<0.000000e+00> : vector<8xf32>
    %64 = vector.multi_reduction <add>, %63, %cst_32 [1] : vector<8x256xf32> to vector<8xf32>
    %65 = vector.shape_cast %64 : vector<8xf32> to vector<8x1xf32>
    %cst_33 = arith.constant 2.560000e+02 : f32
    %66 = vector.broadcast %cst_33 : f32 to vector<8x1xf32>
    %67 = arith.divf %65, %66 : vector<8x1xf32>
    %68 = vector.broadcast %67 : vector<8x1xf32> to vector<8x256xf32>
    %69 = arith.subf %63, %68 : vector<8x256xf32>
    %70 = arith.mulf %69, %69 : vector<8x256xf32>
    %cst_34 = arith.constant dense<0.000000e+00> : vector<8xf32>
    %71 = vector.multi_reduction <add>, %70, %cst_34 [1] : vector<8x256xf32> to vector<8xf32>
    %72 = vector.shape_cast %71 : vector<8xf32> to vector<8x1xf32>
    %cst_35 = arith.constant 2.560000e+02 : f32
    %73 = vector.broadcast %cst_35 : f32 to vector<8x1xf32>
    %74 = arith.divf %72, %73 : vector<8x1xf32>
    %cst_36 = arith.constant 9.99999974E-6 : f32
    %75 = vector.broadcast %cst_36 : f32 to vector<8x1xf32>
    %76 = arith.addf %74, %75 : vector<8x1xf32>
    %77 = math.rsqrt %76 : vector<8x1xf32>
    %78 = vector.broadcast %77 : vector<8x1xf32> to vector<8x256xf32>
    %79 = arith.mulf %69, %78 : vector<8x256xf32>
    %80 = arith.addf %79, %52 : vector<8x256xf32>
    %cst_37 = arith.constant 0.000000e+00 : f32
    %81 = vector.broadcast %cst_37 : f32 to vector<8x256xf32>
    %82 = arith.cmpf ogt, %80, %81 : vector<8x256xf32>
    %cst_38 = arith.constant 2.000000e-01 : f32
    %83 = vector.broadcast %cst_38 : f32 to vector<8x256xf32>
    %84 = arith.mulf %83, %80 : vector<8x256xf32>
    %85 = arith.select %82, %80, %84 : vector<8x256xi1>, vector<8x256xf32>
    %c0_39 = arith.constant 0 : index
    %c0_40 = arith.constant 0 : index
    %c0_41 = arith.constant 0 : index
    %86 = vector.load %arg9[%c0_39, %c0_40, %c0_41] : memref<1x8x256xf32, #tpu.memory_space<vmem>>, vector<1x8x256xf32>
    %87 = vector.shape_cast %86 : vector<1x8x256xf32> to vector<8x256xf32>
    %88 = vector.shape_cast %85 : vector<8x256xf32> to vector<1x8x256xf32>
    tpu.vector_store %arg9[%c0_39, %c0_40, %c0_41], %88 {strides = array<i32>} : memref<1x8x256xf32, #tpu.memory_space<vmem>>, vector<1x8x256xf32>,
    return
  }
  func.func @transform_0(%arg0: i32) -> (i32, i32, i32) {
    %c0_i32 = arith.constant 0 : i32
    %c0_i32_0 = arith.constant 0 : i32
    %c0_i32_1 = arith.constant 0 : i32
    return %arg0, %c0_i32, %c0_i32_0 : i32, i32, i32
  }
  func.func @transform_1(%arg0: i32) -> (i32, i32, i32) {
    %c0_i32 = arith.constant 0 : i32
    %c0_i32_0 = arith.constant 0 : i32
    %c0_i32_1 = arith.constant 0 : i32
    return %arg0, %c0_i32, %c0_i32_0 : i32, i32, i32
  }
  func.func @transform_2(%arg0: i32) -> (i32, i32) {
    %c0_i32 = arith.constant 0 : i32
    %c0_i32_0 = arith.constant 0 : i32
    %c0_i32_1 = arith.constant 0 : i32
    return %c0_i32, %c0_i32_0 : i32, i32
  }
  func.func @transform_3(%arg0: i32) -> (i32, i32) {
    %c0_i32 = arith.constant 0 : i32
    %c0_i32_0 = arith.constant 0 : i32
    %c0_i32_1 = arith.constant 0 : i32
    return %c0_i32, %c0_i32_0 : i32, i32
  }
  func.func @transform_4(%arg0: i32) -> (i32, i32) {
    %c0_i32 = arith.constant 0 : i32
    %c0_i32_0 = arith.constant 0 : i32
    %c0_i32_1 = arith.constant 0 : i32
    return %c0_i32, %c0_i32_0 : i32, i32
  }
  func.func @transform_5(%arg0: i32) -> (i32, i32) {
    %c0_i32 = arith.constant 0 : i32
    %c0_i32_0 = arith.constant 0 : i32
    %c0_i32_1 = arith.constant 0 : i32
    return %c0_i32, %c0_i32_0 : i32, i32
  }
  func.func @transform_6(%arg0: i32) -> (i32, i32) {
    %c0_i32 = arith.constant 0 : i32
    %c0_i32_0 = arith.constant 0 : i32
    %c0_i32_1 = arith.constant 0 : i32
    return %c0_i32, %c0_i32_0 : i32, i32
  }
  func.func @transform_7(%arg0: i32) -> (i32, i32) {
    %c0_i32 = arith.constant 0 : i32
    %c0_i32_0 = arith.constant 0 : i32
    %c0_i32_1 = arith.constant 0 : i32
    return %c0_i32, %c0_i32_0 : i32, i32
  }
  func.func @transform_8(%arg0: i32) -> (i32, i32, i32) {
    %c0_i32 = arith.constant 0 : i32
    %c0_i32_0 = arith.constant 0 : i32
    %c0_i32_1 = arith.constant 0 : i32
    return %arg0, %c0_i32, %c0_i32_0 : i32, i32, i32
  }
}

</mosaic_0001>

<llo_original>
// kernel: upblock_pallas.1
$region0: #{upblock_pallas.1}
  #allocation0 [shape = 'u32[]', space=smem, size = 0x4, offset = 0x4, fixed_abs, tag = 'smem constant byte address 0x4 - core index']
  #allocation1 [shape = 'u32[144,128]{1,0:T(1,128)}', space=vmem, size = 0x12000, scoped, tag = 'internal scratch']
  %s0 = inlined_call_operand.vmem [shape: f32[2,32,8], index: 0, kind: input, shape index: {}]
  %s1 = inlined_call_operand.vmem [shape: f32[2,8,256], index: 1, kind: input, shape index: {}]
  %s2 = inlined_call_operand.vmem [shape: f32[8,256], index: 2, kind: input, shape index: {}]
  %s3 = inlined_call_operand.vmem [shape: f32[8,256], index: 3, kind: input, shape index: {}]
  %s4 = inlined_call_operand.vmem [shape: f32[8,32], index: 4, kind: input, shape index: {}]
  %s5 = inlined_call_operand.vmem [shape: f32[8,8], index: 5, kind: input, shape index: {}]
  %s6 = inlined_call_operand.vmem [shape: f32[8,72], index: 6, kind: input, shape index: {}]
  %s7 = inlined_call_operand.vmem [shape: f32[72,256], index: 7, kind: input, shape index: {}]
  %s8 = inlined_call_operand.vmem [shape: f32[2,8,256], index: 8, kind: output, shape index: {}]
  %s9 = sld [smem:[#allocation0]]
  $region65: #{upblock_pallas.1} parent=0
    _
  %s11 = ssub.s32 1, %s9
  %s12 = scalar_select 0, %s11, %s9
  loop: start=0, step=1, limit=4
  $region2: #{upblock_pallas.1} parent=0 // loop_pre_header
    _
  $region3: #{upblock_pallas.1} parent=0 // loop_header
    %s14 = sphi 0, %s18
    %p15 = scmp.ge.s32.totalorder %s14, 4
    %s24 = sphi 0, %s26
    %s27 = sphi 0, %s24
    %s28 = sphi 0, %s27
    %s44 = sphi 0, %s28
    %s50 = sphi 0, %s52
    %s53 = sphi 0, %s50
    %s54 = sphi 0, %s53
    %s70 = sphi 0, %s54
    %s74 = sphi 0, %s74
    %s76 = sphi 0, %s74
    %s77 = sphi 0, %s76
    %s91 = sphi 0, %s77
    %s95 = sphi 0, %s95
    %s97 = sphi 0, %s95
    %s98 = sphi 0, %s97
    %s112 = sphi 0, %s98
    %s116 = sphi 0, %s116
    %s118 = sphi 0, %s116
    %s119 = sphi 0, %s118
    %s133 = sphi 0, %s119
    %s137 = sphi 0, %s137
    %s139 = sphi 0, %s137
    %s140 = sphi 0, %s139
    %s154 = sphi 0, %s140
    %s158 = sphi 0, %s158
    %s160 = sphi 0, %s158
    %s161 = sphi 0, %s160
    %s175 = sphi 0, %s161
    %s179 = sphi 0, %s179
    %s181 = sphi 0, %s179
    %s182 = sphi 0, %s181
    %s196 = sphi 0, %s182
    %s202 = sphi 0, %s204
    %s205 = sphi 0, %s202
    %s206 = sphi 0, %s205
    %s222 = sphi 0, %s206
  $region4: #{upblock_pallas.1} parent=0 // loop_header_branch
    %17 = sbr.rel (%p15) target = $region8
  $region5: #{upblock_pallas.1} parent=0 // loop_body
    %s19 = ssub.s32 %s14, 1
    %s20 = ssub.s32 %s14, 2
    %s21 = sadd.s32 %s14, 1
    %s22 = ssub.s32 %s14, %s21
    %p23 = scmp.eq.s32.totalorder %s22, 0
    %s25 = sadd.s32 %s24, 1
    %s26 = scalar_select %p23, %s24, %s25
    %p29 = pneg %p23
    %p30 = scmp.eq.s32.totalorder %s14, 1
    %p31 = por %p29, %p30
    %p32 = scmp.ne.s32.totalorder %s24, %s27
    %p33 = scmp.eq.s32.totalorder %s14, 0
    %p34 = por %p32, %p33
    %p35 = scmp.ne.s32.totalorder %s24, %s27
    %p36 = scmp.eq.s32.totalorder %s19, 1
    %p37 = por %p35, %p36
    %p38 = scmp.ne.s32.totalorder %s27, %s28
    %p39 = scmp.eq.s32.totalorder %s19, 0
    %p40 = por %p38, %p39
    %p41 = scmp.ne.s32.totalorder %s27, %s28
    %p42 = scmp.eq.s32.totalorder %s20, 1
    %p43 = por %p41, %p42
    %p45 = scmp.ne.s32.totalorder %s28, %s44
    %p46 = scmp.eq.s32.totalorder %s20, 0
    %p47 = por %p45, %p46
    %s48 = ssub.s32 %s14, %s21
    %p49 = scmp.eq.s32.totalorder %s48, 0
    %s51 = sadd.s32 %s50, 1
    %s52 = scalar_select %p49, %s50, %s51
    %p55 = pneg %p49
    %p56 = scmp.eq.s32.totalorder %s14, 1
    %p57 = por %p55, %p56
    %p58 = scmp.ne.s32.totalorder %s50, %s53
    %p59 = scmp.eq.s32.totalorder %s14, 0
    %p60 = por %p58, %p59
    %p61 = scmp.ne.s32.totalorder %s50, %s53
    %p62 = scmp.eq.s32.totalorder %s19, 1
    %p63 = por %p61, %p62
    %p64 = scmp.ne.s32.totalorder %s53, %s54
    %p65 = scmp.eq.s32.totalorder %s19, 0
    %p66 = por %p64, %p65
    %p67 = scmp.ne.s32.totalorder %s53, %s54
    %p68 = scmp.eq.s32.totalorder %s20, 1
    %p69 = por %p67, %p68
    %p71 = scmp.ne.s32.totalorder %s54, %s70
    %p72 = scmp.eq.s32.totalorder %s20, 0
    %p73 = por %p71, %p72
    %s75 = sadd.s32 %s74, 1
    %p78 = scmp.eq.s32.totalorder %s14, 1
    %p79 = scmp.ne.s32.totalorder %s74, %s76
    %p80 = scmp.eq.s32.totalorder %s14, 0
    %p81 = por %p79, %p80
    %p82 = scmp.ne.s32.totalorder %s74, %s76
    %p83 = scmp.eq.s32.totalorder %s19, 1
    %p84 = por %p82, %p83
    %p85 = scmp.ne.s32.totalorder %s76, %s77
    %p86 = scmp.eq.s32.totalorder %s19, 0
    %p87 = por %p85, %p86
    %p88 = scmp.ne.s32.totalorder %s76, %s77
    %p89 = scmp.eq.s32.totalorder %s20, 1
    %p90 = por %p88, %p89
    %p92 = scmp.ne.s32.totalorder %s77, %s91
    %p93 = scmp.eq.s32.totalorder %s20, 0
    %p94 = por %p92, %p93
    %s96 = sadd.s32 %s95, 1
    %p99 = scmp.eq.s32.totalorder %s14, 1
    %p100 = scmp.ne.s32.totalorder %s95, %s97
    %p101 = scmp.eq.s32.totalorder %s14, 0
    %p102 = por %p100, %p101
    %p103 = scmp.ne.s32.totalorder %s95, %s97
    %p104 = scmp.eq.s32.totalorder %s19, 1
    %p105 = por %p103, %p104
    %p106 = scmp.ne.s32.totalorder %s97, %s98
    %p107 = scmp.eq.s32.totalorder %s19, 0
    %p108 = por %p106, %p107
    %p109 = scmp.ne.s32.totalorder %s97, %s98
    %p110 = scmp.eq.s32.totalorder %s20, 1
    %p111 = por %p109, %p110
    %p113 = scmp.ne.s32.totalorder %s98, %s112
    %p114 = scmp.eq.s32.totalorder %s20, 0
    %p115 = por %p113, %p114
    %s117 = sadd.s32 %s116, 1
    %p120 = scmp.eq.s32.totalorder %s14, 1
    %p121 = scmp.ne.s32.totalorder %s116, %s118
    %p122 = scmp.eq.s32.totalorder %s14, 0
    %p123 = por %p121, %p122
    %p124 = scmp.ne.s32.totalorder %s116, %s118
    %p125 = scmp.eq.s32.totalorder %s19, 1
    %p126 = por %p124, %p125
    %p127 = scmp.ne.s32.totalorder %s118, %s119
    %p128 = scmp.eq.s32.totalorder %s19, 0
    %p129 = por %p127, %p128
    %p130 = scmp.ne.s32.totalorder %s118, %s119
    %p131 = scmp.eq.s32.totalorder %s20, 1
    %p132 = por %p130, %p131
    %p134 = scmp.ne.s32.totalorder %s119, %s133
    %p135 = scmp.eq.s32.totalorder %s20, 0
    %p136 = por %p134, %p135
    %s138 = sadd.s32 %s137, 1
    %p141 = scmp.eq.s32.totalorder %s14, 1
    %p142 = scmp.ne.s32.totalorder %s137, %s139
    %p143 = scmp.eq.s32.totalorder %s14, 0
    %p144 = por %p142, %p143
    %p145 = scmp.ne.s32.totalorder %s137, %s139
    %p146 = scmp.eq.s32.totalorder %s19, 1
    %p147 = por %p145, %p146
    %p148 = scmp.ne.s32.totalorder %s139, %s140
    %p149 = scmp.eq.s32.totalorder %s19, 0
    %p150 = por %p148, %p149
    %p151 = scmp.ne.s32.totalorder %s139, %s140
    %p152 = scmp.eq.s32.totalorder %s20, 1
    %p153 = por %p151, %p152
    %p155 = scmp.ne.s32.totalorder %s140, %s154
    %p156 = scmp.eq.s32.totalorder %s20, 0
    %p157 = por %p155, %p156
    %s159 = sadd.s32 %s158, 1
    %p162 = scmp.eq.s32.totalorder %s14, 1
    %p163 = scmp.ne.s32.totalorder %s158, %s160
    %p164 = scmp.eq.s32.totalorder %s14, 0
    %p165 = por %p163, %p164
    %p166 = scmp.ne.s32.totalorder %s158, %s160
    %p167 = scmp.eq.s32.totalorder %s19, 1
    %p168 = por %p166, %p167
    %p169 = scmp.ne.s32.totalorder %s160, %s161
    %p170 = scmp.eq.s32.totalorder %s19, 0
    %p171 = por %p169, %p170
    %p172 = scmp.ne.s32.totalorder %s160, %s161
    %p173 = scmp.eq.s32.totalorder %s20, 1
    %p174 = por %p172, %p173
    %p176 = scmp.ne.s32.totalorder %s161, %s175
    %p177 = scmp.eq.s32.totalorder %s20, 0
    %p178 = por %p176, %p177
    %s180 = sadd.s32 %s179, 1
    %p183 = scmp.eq.s32.totalorder %s14, 1
    %p184 = scmp.ne.s32.totalorder %s179, %s181
    %p185 = scmp.eq.s32.totalorder %s14, 0
    %p186 = por %p184, %p185
    %p187 = scmp.ne.s32.totalorder %s179, %s181
    %p188 = scmp.eq.s32.totalorder %s19, 1
    %p189 = por %p187, %p188
    %p190 = scmp.ne.s32.totalorder %s181, %s182
    %p191 = scmp.eq.s32.totalorder %s19, 0
    %p192 = por %p190, %p191
    %p193 = scmp.ne.s32.totalorder %s181, %s182
    %p194 = scmp.eq.s32.totalorder %s20, 1
    %p195 = por %p193, %p194
    %p197 = scmp.ne.s32.totalorder %s182, %s196
    %p198 = scmp.eq.s32.totalorder %s20, 0
    %p199 = por %p197, %p198
    %s200 = ssub.s32 %s14, %s21
    %p201 = scmp.eq.s32.totalorder %s200, 0
    %s203 = sadd.s32 %s202, 1
    %s204 = scalar_select %p201, %s202, %s203
    %p207 = pneg %p201
    %p208 = scmp.eq.s32.totalorder %s14, 1
    %p209 = por %p207, %p208
    %p210 = scmp.ne.s32.totalorder %s202, %s205
    %p211 = scmp.eq.s32.totalorder %s14, 0
    %p212 = por %p210, %p211
    %p213 = scmp.ne.s32.totalorder %s202, %s205
    %p214 = scmp.eq.s32.totalorder %s19, 1
    %p215 = por %p213, %p214
    %p216 = scmp.ne.s32.totalorder %s205, %s206
    %p217 = scmp.eq.s32.totalorder %s19, 0
    %p218 = por %p216, %p217
    %p219 = scmp.ne.s32.totalorder %s205, %s206
    %p220 = scmp.eq.s32.totalorder %s20, 1
    %p221 = por %p219, %p220
    %p223 = scmp.ne.s32.totalorder %s206, %s222
    %p224 = scmp.eq.s32.totalorder %s20, 0
    %p225 = por %p223, %p224
    %p226 = scmp.le.s32.totalorder 1, %s14
    %p227 = scmp.lt.s32.totalorder %s14, 3
    %p228 = pnand %p226, %p227
    %p229 = pneg %p228
    // Predicated region
    $region9: #{upblock_pallas.1} parent=5 // pred_check
      _
    $region10: #{upblock_pallas.1} parent=5 // pred_check_branch
      %231 = sbr.rel (%p228) target = $region12
    $region11: #{upblock_pallas.1} parent=5 // pred_region
      %s232 = ssub.s32 %s14, 1
      // Predicated region
      $region13: #{upblock_pallas.1} parent=11 // pred_check
        %p233 = pneg %p87
      $region14: #{upblock_pallas.1} parent=11 // pred_check_branch
        %235 = sbr.rel (%p233) target = $region16
      $region15: #{upblock_pallas.1} parent=11 // pred_region
        _
      $region16: #{upblock_pallas.1} parent=11 // pred_fallthru
        _
      // Predicated region
      $region17: #{upblock_pallas.1} parent=11 // pred_check
        %p236 = pneg %p108
      $region18: #{upblock_pallas.1} parent=11 // pred_check_branch
        %238 = sbr.rel (%p236) target = $region20
      $region19: #{upblock_pallas.1} parent=11 // pred_region
        _
      $region20: #{upblock_pallas.1} parent=11 // pred_fallthru
        _
      // Predicated region
      $region21: #{upblock_pallas.1} parent=11 // pred_check
        %p239 = pneg %p129
      $region22: #{upblock_pallas.1} parent=11 // pred_check_branch
        %241 = sbr.rel (%p239) target = $region24
      $region23: #{upblock_pallas.1} parent=11 // pred_region
        _
      $region24: #{upblock_pallas.1} parent=11 // pred_fallthru
        _
      // Predicated region
      $region25: #{upblock_pallas.1} parent=11 // pred_check
        %p242 = pneg %p150
      $region26: #{upblock_pallas.1} parent=11 // pred_check_branch
        %244 = sbr.rel (%p242) target = $region28
      $region27: #{upblock_pallas.1} parent=11 // pred_region
        _
      $region28: #{upblock_pallas.1} parent=11 // pred_fallthru
        _
      // Predicated region
      $region29: #{upblock_pallas.1} parent=11 // pred_check
        %p245 = pneg %p171
      $region30: #{upblock_pallas.1} parent=11 // pred_check_branch
        %247 = sbr.rel (%p245) target = $region32
      $region31: #{upblock_pallas.1} parent=11 // pred_region
        _
      $region32: #{upblock_pallas.1} parent=11 // pred_fallthru
        _
      // Predicated region
      $region33: #{upblock_pallas.1} parent=11 // pred_check
        %p248 = pneg %p192
      $region34: #{upblock_pallas.1} parent=11 // pred_check_branch
        %250 = sbr.rel (%p248) target = $region36
      $region35: #{upblock_pallas.1} parent=11 // pred_region
        _
      $region36: #{upblock_pallas.1} parent=11 // pred_fallthru
        _
    $region12: #{upblock_pallas.1} parent=5 // pred_fallthru
      _
    %p251 = scmp.lt.s32.totalorder %s14, 2
    // Predicated region
    $region37: #{upblock_pallas.1} parent=5 // pred_check
      %p252 = pneg %p251
    $region38: #{upblock_pallas.1} parent=5 // pred_check_branch
      %254 = sbr.rel (%p252) target = $region40
    $region39: #{upblock_pallas.1} parent=5 // pred_region
      // Predicated region
      $region41: #{upblock_pallas.1} parent=39 // pred_check
        %p255 = pneg %p34
      $region42: #{upblock_pallas.1} parent=39 // pred_check_branch
        %257 = sbr.rel (%p255) target = $region44
      $region43: #{upblock_pallas.1} parent=39 // pred_region
        %p258 = scmp.lt.s32.totalorder %s14, 1
        %s259 = scalar_select %p258, %s14, 1
        %s260 = smul.addr %s259, 4
        %s261 = smul.addr %s260, 8
        %s262 = scalar_lea.vmem %s0, %s261
      $region44: #{upblock_pallas.1} parent=39 // pred_fallthru
        _
      // Predicated region
      $region45: #{upblock_pallas.1} parent=39 // pred_check
        %p263 = pneg %p60
      $region46: #{upblock_pallas.1} parent=39 // pred_check_branch
        %265 = sbr.rel (%p263) target = $region48
      $region47: #{upblock_pallas.1} parent=39 // pred_region
        %p266 = scmp.lt.s32.totalorder %s14, 1
        %s267 = scalar_select %p266, %s14, 1
        %s268 = smul.addr %s267, 2
        %s269 = smul.addr %s268, 8
        %s270 = scalar_lea.vmem %s1, %s269
      $region48: #{upblock_pallas.1} parent=39 // pred_fallthru
        _
    $region40: #{upblock_pallas.1} parent=5 // pred_fallthru
      _
    %p271 = scmp.le.s32.totalorder 1, %s14
    %p272 = scmp.lt.s32.totalorder %s14, 3
    %p273 = pnand %p271, %p272
    %p274 = pneg %p273
    // Predicated region
    $region49: #{upblock_pallas.1} parent=5 // pred_check
      _
    $region50: #{upblock_pallas.1} parent=5 // pred_check_branch
      %276 = sbr.rel (%p273) target = $region52
    $region51: #{upblock_pallas.1} parent=5 // pred_region
      %s277 = ssub.s32 %s14, 1
      %p278 = scmp.lt.s32.totalorder %s19, 1
      %s279 = scalar_select %p278, %s19, 1
      %s280 = smul.addr %s279, 4
      %s281 = smul.addr %s280, 8
      %s282 = scalar_lea.vmem %s0, %s281
      %p283 = pneg %p40
      %p284 = pneg %p37
      %p285 = scmp.lt.s32.totalorder %s19, 1
      %s286 = scalar_select %p285, %s19, 1
      %s287 = smul.addr %s286, 2
      %s288 = smul.addr %s287, 8
      %s289 = scalar_lea.vmem %s1, %s288
      %p290 = pneg %p66
      %p291 = pneg %p63
      %p292 = pneg %p87
      %p293 = pneg %p84
      %p294 = pneg %p108
      %p295 = pneg %p105
      %p296 = pneg %p129
      %p297 = pneg %p126
      %p298 = pneg %p150
      %p299 = pneg %p147
      %p300 = pneg %p171
      %p301 = pneg %p168
      %p302 = pneg %p192
      %p303 = pneg %p189
      %p304 = pneg %p218
      %p305 = pneg %p215
      %p306 = scmp.lt.s32.totalorder %s19, 1
      %s307 = scalar_select %p306, %s19, 1
      %s308 = smul.addr %s307, 2
      %s309 = smul.addr %s308, 8
      %s310 = scalar_lea.vmem %s8, %s309
      %p311 = scmp.lt.s32.totalorder %s19, 1
      %s312 = scalar_select %p311, %s19, 1
      %s313 = smul.addr %s312, 4
      %s314 = smul.addr %s313, 8
      %s315 = scalar_lea.vmem %s0, %s314
      %p316 = scmp.lt.s32.totalorder %s19, 1
      %s317 = scalar_select %p316, %s19, 1
      %s318 = smul.addr %s317, 2
      %s319 = smul.addr %s318, 8
      %s320 = scalar_lea.vmem %s1, %s319
      %p321 = scmp.lt.s32.totalorder %s19, 1
      %s322 = scalar_select %p321, %s19, 1
      %s323 = smul.addr %s322, 2
      %s324 = smul.addr %s323, 8
      %s325 = scalar_lea.vmem %s8, %s324
      %v326 = vld [vmem:[%s2] sm:$0xff]
      %v327 = vld [vmem:[%s2 + $0x8] sm:$0xff]
      %v328 = vld [vmem:[%s3] sm:$0xff]
      %v329 = vld [vmem:[%s3 + $0x8] sm:$0xff]
      %v330 = vld [vmem:[%s4] sm:$0xff]
      %v331 = vld [vmem:[%s5] sm:$0xff]
      %v332 = vld [vmem:[%s6] sm:$0xff]
      %v333 = vld [vmem:[%s7] sm:$0xff]
      %v334 = vld [vmem:[%s7 + $0x8] sm:$0xff]
      %v335 = vld [vmem:[%s7 + $0x10] sm:$0xff]
      %v336 = vld [vmem:[%s7 + $0x18] sm:$0xff]
      %v337 = vld [vmem:[%s7 + $0x20] sm:$0xff]
      %v338 = vld [vmem:[%s7 + $0x28] sm:$0xff]
      %v339 = vld [vmem:[%s7 + $0x30] sm:$0xff]
      %v340 = vld [vmem:[%s7 + $0x38] sm:$0xff]
      %v341 = vld [vmem:[%s7 + $0x40] sm:$0xff]
      %v342 = vld [vmem:[%s7 + $0x48] sm:$0xff]
      %v343 = vld [vmem:[%s7 + $0x50] sm:$0xff]
      %v344 = vld [vmem:[%s7 + $0x58] sm:$0xff]
      %v345 = vld [vmem:[%s7 + $0x60] sm:$0xff]
      %v346 = vld [vmem:[%s7 + $0x68] sm:$0xff]
      %v347 = vld [vmem:[%s7 + $0x70] sm:$0xff]
      %v348 = vld [vmem:[%s7 + $0x78] sm:$0xff]
      %v349 = vld [vmem:[%s7 + $0x80] sm:$0xff]
      %v350 = vld [vmem:[%s7 + $0x88] sm:$0xff]
      %v351 = vld [vmem:[%s315] sm:$0xff]
      %v352 = vld [vmem:[%s315 + $0x8] sm:$0xff]
      %v353 = vld [vmem:[%s315 + $0x10] sm:$0xff]
      %v354 = vld [vmem:[%s315 + $0x18] sm:$0xff]
      %vm355 = vcmask 64512
      %v357 = vsel %vm355, %v351, 0
      %v360 = vsel %vm355, %v352, 0
      %v363 = vsel %vm355, %v353, 0
      %v366 = vsel %vm355, %v354, 0
      %368 = vmatprep.subr.mxu0 %v327
      %369 = vmatpush1.msra.mxu0 %v326
      %370 = vmatprep.subr.mxu0 0.0
      %371 = vmatpush1.msra.mxu0 0.0
      %372 = vmatprep.subr.mxu0 0.0
      %373 = vmatpush1.msra.mxu0 0.0
      %374 = vmatprep.subr.mxu0 0.0
      %375 = vmatpush1.msra.mxu0 0.0
      %376 = vmatprep.subr.mxu0 0.0
      %377 = vmatpush1.msra.mxu0 0.0
      %378 = vmatprep.subr.mxu0 0.0
      %379 = vmatpush1.msra.mxu0 0.0
      %380 = vmatprep.subr.mxu0 0.0
      %381 = vmatpush1.msra.mxu0 0.0
      %382 = vmatprep.subr.mxu0 0.0
      %383 = vmatpush1.msra.mxu0 0.0
      %384 = vmatprep.subr.mxu0 0.0
      %385 = vmatpush1.msra.mxu0 0.0
      %386 = vmatprep.subr.mxu0 0.0
      %387 = vmatpush1.msra.mxu0 0.0
      %388 = vmatprep.subr.mxu0 0.0
      %389 = vmatpush1.msra.mxu0 0.0
      %390 = vmatprep.subr.mxu0 0.0
      %391 = vmatpush1.msra.mxu0 0.0
      %392 = vmatprep.subr.mxu0 0.0
      %393 = vmatpush1.msra.mxu0 0.0
      %394 = vmatprep.subr.mxu0 0.0
      %395 = vmatpush1.msra.mxu0 0.0
      %396 = vmatprep.subr.mxu0 0.0
      %397 = vmatpush1.msra.mxu0 0.0
      %398 = vmatprep.subr.mxu0 0.0
      %399 = vmatpush1.msra.mxu0 0.0
      %400 = vmatprep.subr.mxu0 0.0
      %401 = vmatpush1.msra.mxu0 0.0
      %402 = vmatprep.subr.mxu0 0.0
      %403 = vmatpush1.msra.mxu0 0.0
      %404 = vmatprep.subr.mxu0 0.0
      %405 = vmatpush1.msra.mxu0 0.0
      %406 = vmatprep.subr.mxu0 0.0
      %407 = vmatpush1.msra.mxu0 0.0
      %408 = vmatprep.subr.mxu0 0.0
      %409 = vmatpush1.msra.mxu0 0.0
      %410 = vmatprep.subr.mxu0 0.0
      %411 = vmatpush1.msra.mxu0 0.0
      %412 = vmatprep.subr.mxu0 0.0
      %413 = vmatpush1.msra.mxu0 0.0
      %414 = vmatprep.subr.mxu0 0.0
      %415 = vmatpush1.msra.mxu0 0.0
      %416 = vmatprep.subr.mxu0 0.0
      %417 = vmatpush1.msra.mxu0 0.0
      %418 = vmatprep.subr.mxu0 0.0
      %419 = vmatpush1.msra.mxu0 0.0
      %420 = vmatprep.subr.mxu0 0.0
      %421 = vmatpush1.msra.mxu0 0.0
      %422 = vmatprep.subr.mxu0 0.0
      %423 = vmatpush1.msra.mxu0 0.0
      %424 = vmatprep.subr.mxu0 0.0
      %425 = vmatpush1.msra.mxu0 0.0
      %426 = vmatprep.subr.mxu0 0.0
      %427 = vmatpush1.msra.mxu0 0.0
      %428 = vmatprep.subr.mxu0 0.0
      %429 = vmatpush1.msra.mxu0 0.0
      %430 = vmatprep.subr.mxu0 0.0
      %431 = vmatpush1.msra.mxu0 0.0
      %432 = vmatprep.mubr.f32.mxu0 0.0
      %433 = vmatmul.mubr.f32.gmra.mrb[0].mxu0 %v357
      %v434 = vpop.f32.mrb[0].mxu0
      %v435 = vadd.f32 0.0, %v434
      %v436 = vpop.f32.mrb[0].mxu0
      %v437 = vadd.f32 0.0, %v436
      %438 = vmatprep.mubr.f32.mxu0 0.0
      %439 = vmatmul.mubr.f32.gmra.mrb[0].mxu0 %v360
      %v440 = vpop.f32.mrb[0].mxu0
      %v441 = vadd.f32 0.0, %v440
      %v442 = vpop.f32.mrb[0].mxu0
      %v443 = vadd.f32 0.0, %v442
      %444 = vmatprep.mubr.f32.mxu0 0.0
      %445 = vmatmul.mubr.f32.gmra.mrb[0].mxu0 %v363
      %v446 = vpop.f32.mrb[0].mxu0
      %v447 = vadd.f32 0.0, %v446
      %v448 = vpop.f32.mrb[0].mxu0
      %v449 = vadd.f32 0.0, %v448
      %450 = vmatprep.mubr.f32.mxu0 0.0
      %451 = vmatmul.mubr.f32.gmra.mrb[0].mxu0 %v366
      %v452 = vpop.f32.mrb[0].mxu0
      %v453 = vadd.f32 0.0, %v452
      %v454 = vpop.f32.mrb[0].mxu0
      %v455 = vadd.f32 0.0, %v454
      %456 = vdwg.mxu0
      %v457 = vmul.f32 %v328, %v435
      %v458 = vmul.f32 %v329, %v437
      %v459 = vmul.f32 %v328, %v441
      %v460 = vmul.f32 %v329, %v443
      %v461 = vmul.f32 %v328, %v447
      %v462 = vmul.f32 %v329, %v449
      %v463 = vmul.f32 %v328, %v453
      %v464 = vmul.f32 %v329, %v455
      %vm465 = vcmask 261120
      %v467 = vsel %vm465, %v330, 0
      %469 = vmatprep.subr.mxu0 %v458
      %470 = vmatpush1.msra.mxu0 %v457
      %471 = vmatprep.subr.mxu0 %v460
      %472 = vmatpush1.msra.mxu0 %v459
      %473 = vmatprep.subr.mxu0 %v462
      %474 = vmatpush1.msra.mxu0 %v461
      %475 = vmatprep.subr.mxu0 %v464
      %476 = vmatpush1.msra.mxu0 %v463
      %477 = vmatprep.subr.mxu0 0.0
      %478 = vmatpush1.msra.mxu0 0.0
      %479 = vmatprep.subr.mxu0 0.0
      %480 = vmatpush1.msra.mxu0 0.0
      %481 = vmatprep.subr.mxu0 0.0
      %482 = vmatpush1.msra.mxu0 0.0
      %483 = vmatprep.subr.mxu0 0.0
      %484 = vmatpush1.msra.mxu0 0.0
      %485 = vmatprep.subr.mxu0 0.0
      %486 = vmatpush1.msra.mxu0 0.0
      %487 = vmatprep.subr.mxu0 0.0
      %488 = vmatpush1.msra.mxu0 0.0
      %489 = vmatprep.subr.mxu0 0.0
      %490 = vmatpush1.msra.mxu0 0.0
      %491 = vmatprep.subr.mxu0 0.0
      %492 = vmatpush1.msra.mxu0 0.0
      %493 = vmatprep.subr.mxu0 0.0
      %494 = vmatpush1.msra.mxu0 0.0
      %495 = vmatprep.subr.mxu0 0.0
      %496 = vmatpush1.msra.mxu0 0.0
      %497 = vmatprep.subr.mxu0 0.0
      %498 = vmatpush1.msra.mxu0 0.0
      %499 = vmatprep.subr.mxu0 0.0
      %500 = vmatpush1.msra.mxu0 0.0
      %501 = vmatprep.subr.mxu0 0.0
      %502 = vmatpush1.msra.mxu0 0.0
      %503 = vmatprep.subr.mxu0 0.0
      %504 = vmatpush1.msra.mxu0 0.0
      %505 = vmatprep.subr.mxu0 0.0
      %506 = vmatpush1.msra.mxu0 0.0
      %507 = vmatprep.subr.mxu0 0.0
      %508 = vmatpush1.msra.mxu0 0.0
      %509 = vmatprep.subr.mxu0 0.0
      %510 = vmatpush1.msra.mxu0 0.0
      %511 = vmatprep.subr.mxu0 0.0
      %512 = vmatpush1.msra.mxu0 0.0
      %513 = vmatprep.subr.mxu0 0.0
      %514 = vmatpush1.msra.mxu0 0.0
      %515 = vmatprep.subr.mxu0 0.0
      %516 = vmatpush1.msra.mxu0 0.0
      %517 = vmatprep.subr.mxu0 0.0
      %518 = vmatpush1.msra.mxu0 0.0
      %519 = vmatprep.subr.mxu0 0.0
      %520 = vmatpush1.msra.mxu0 0.0
      %521 = vmatprep.subr.mxu0 0.0
      %522 = vmatpush1.msra.mxu0 0.0
      %523 = vmatprep.subr.mxu0 0.0
      %524 = vmatpush1.msra.mxu0 0.0
      %525 = vmatprep.subr.mxu0 0.0
      %526 = vmatpush1.msra.mxu0 0.0
      %527 = vmatprep.subr.mxu0 0.0
      %528 = vmatpush1.msra.mxu0 0.0
      %529 = vmatprep.subr.mxu0 0.0
      %530 = vmatpush1.msra.mxu0 0.0
      %531 = vmatprep.subr.mxu0 0.0
      %532 = vmatpush1.msra.mxu0 0.0
      %533 = vmatprep.mubr.f32.mxu0 0.0
      %534 = vmatmul.mubr.f32.gmra.mrb[0].mxu0 %v467
      %v535 = vpop.f32.mrb[0].mxu0
      %v536 = vadd.f32 0.0, %v535
      %v537 = vpop.f32.mrb[0].mxu0
      %v538 = vadd.f32 0.0, %v537
      %539 = vdwg.mxu0
      %v540 = vadd.f32 %v536, %v538
      %541 = vadd.xlane.f32.xlu0 %v540
      %v542 = vpop.xlane.xlu0 %541
      %v543 = vrcp.pop 256.0
      %v544 = vmul.f32 %v542, %v543
      %v545 = vsub.f32 %v536, %v544
      %v546 = vsub.f32 %v538, %v544
      %v547 = vmul.f32 %v545, %v545
      %v548 = vmul.f32 %v546, %v546
      %v549 = vadd.f32 %v547, %v548
      %550 = vadd.xlane.f32.xlu0 %v549
      %v551 = vpop.xlane.xlu0 %550
      %v552 = vmul.f32 %v551, %v543
      %v553 = vadd.f32 %v552, 1e-05
      %v554 = vrsqrt.pop %v553
      %v555 = vmul.f32 %v545, %v554
      %v556 = vmul.f32 %v546, %v554
      %v557 = vld [vmem:[%s320] sm:$0xff]
      %v558 = vld [vmem:[%s320 + $0x8] sm:$0xff]
      %v559 = vadd.f32 %v555, %v557
      %v560 = vadd.f32 %v556, %v558
      %v562 = vsel %vm355, %v331, 0
      %564 = vmatprep.subr.mxu0 %v560
      %565 = vmatpush1.msra.mxu0 %v559
      %566 = vmatprep.subr.mxu0 0.0
      %567 = vmatpush1.msra.mxu0 0.0
      %568 = vmatprep.subr.mxu0 0.0
      %569 = vmatpush1.msra.mxu0 0.0
      %570 = vmatprep.subr.mxu0 0.0
      %571 = vmatpush1.msra.mxu0 0.0
      %572 = vmatprep.subr.mxu0 0.0
      %573 = vmatpush1.msra.mxu0 0.0
      %574 = vmatprep.subr.mxu0 0.0
      %575 = vmatpush1.msra.mxu0 0.0
      %576 = vmatprep.subr.mxu0 0.0
      %577 = vmatpush1.msra.mxu0 0.0
      %578 = vmatprep.subr.mxu0 0.0
      %579 = vmatpush1.msra.mxu0 0.0
      %580 = vmatprep.subr.mxu0 0.0
      %581 = vmatpush1.msra.mxu0 0.0
      %582 = vmatprep.subr.mxu0 0.0
      %583 = vmatpush1.msra.mxu0 0.0
      %584 = vmatprep.subr.mxu0 0.0
      %585 = vmatpush1.msra.mxu0 0.0
      %586 = vmatprep.subr.mxu0 0.0
      %587 = vmatpush1.msra.mxu0 0.0
      %588 = vmatprep.subr.mxu0 0.0
      %589 = vmatpush1.msra.mxu0 0.0
      %590 = vmatprep.subr.mxu0 0.0
      %591 = vmatpush1.msra.mxu0 0.0
      %592 = vmatprep.subr.mxu0 0.0
      %593 = vmatpush1.msra.mxu0 0.0
      %594 = vmatprep.subr.mxu0 0.0
      %595 = vmatpush1.msra.mxu0 0.0
      %596 = vmatprep.subr.mxu0 0.0
      %597 = vmatpush1.msra.mxu0 0.0
      %598 = vmatprep.subr.mxu0 0.0
      %599 = vmatpush1.msra.mxu0 0.0
      %600 = vmatprep.subr.mxu0 0.0
      %601 = vmatpush1.msra.mxu0 0.0
      %602 = vmatprep.subr.mxu0 0.0
      %603 = vmatpush1.msra.mxu0 0.0
      %604 = vmatprep.subr.mxu0 0.0
      %605 = vmatpush1.msra.mxu0 0.0
      %606 = vmatprep.subr.mxu0 0.0
      %607 = vmatpush1.msra.mxu0 0.0
      %608 = vmatprep.subr.mxu0 0.0
      %609 = vmatpush1.msra.mxu0 0.0
      %610 = vmatprep.subr.mxu0 0.0
      %611 = vmatpush1.msra.mxu0 0.0
      %612 = vmatprep.subr.mxu0 0.0
      %613 = vmatpush1.msra.mxu0 0.0
      %614 = vmatprep.subr.mxu0 0.0
      %615 = vmatpush1.msra.mxu0 0.0
      %616 = vmatprep.subr.mxu0 0.0
      %617 = vmatpush1.msra.mxu0 0.0
      %618 = vmatprep.subr.mxu0 0.0
      %619 = vmatpush1.msra.mxu0 0.0
      %620 = vmatprep.subr.mxu0 0.0
      %621 = vmatpush1.msra.mxu0 0.0
      %622 = vmatprep.subr.mxu0 0.0
      %623 = vmatpush1.msra.mxu0 0.0
      %624 = vmatprep.subr.mxu0 0.0
      %625 = vmatpush1.msra.mxu0 0.0
      %626 = vmatprep.subr.mxu0 0.0
      %627 = vmatpush1.msra.mxu0 0.0
      %628 = vmatprep.mubr.f32.mxu0 0.0
      %629 = vmatmul.mubr.f32.gmra.mrb[0].mxu0 %v562
      %v630 = vpop.f32.mrb[0].mxu0
      %v631 = vadd.f32 0.0, %v630
      %v632 = vpop.f32.mrb[0].mxu0
      %v633 = vadd.f32 0.0, %v632
      %634 = vdwg.mxu0
      %v635 = vadd.f32 %v631, %v633
      %636 = vadd.xlane.f32.xlu0 %v635
      %v637 = vpop.xlane.xlu0 %636
      %v638 = vmul.f32 %v637, %v543
      %v639 = vsub.f32 %v631, %v638
      %v640 = vsub.f32 %v633, %v638
      %v641 = vmul.f32 %v639, %v639
      %v642 = vmul.f32 %v640, %v640
      %v643 = vadd.f32 %v641, %v642
      %644 = vadd.xlane.f32.xlu0 %v643
      %v645 = vpop.xlane.xlu0 %644
      %v646 = vmul.f32 %v645, %v543
      %v647 = vadd.f32 %v646, 1e-05
      %v648 = vrsqrt.pop %v647
      %v649 = vmul.f32 %v639, %v648
      %v650 = vmul.f32 %v640, %v648
      %vm651 = vcmp.gt.f32.partialorder %v649, 0.0
      %vm652 = vcmp.gt.f32.partialorder %v650, 0.0
      %v653 = vmul.f32 %v649, 0.2
      %v654 = vmul.f32 %v650, 0.2
      %v655 = vsel %vm651, %v649, %v653
      %v656 = vsel %vm652, %v650, %v654
      %657 = vrot.lane.b32.xlu0 %v655, 17
      %v658 = vpop.permute.xlu0 %657
      %659 = vrot.lane.b32.xlu0 %v656, 17
      %v660 = vpop.permute.xlu0 %659
      %v661 = vlaneseq
      %v662 = vand.u32 %v661, 127
      %vm663 = vcmp.lt.s32.totalorder %v662, 17
      %v664 = vsel %vm663, %v658, %v660
      %v665 = vsel %vm663, %v660, %v658
      %666 = vrot.lane.b32.xlu0 %v655, 16
      %v667 = vpop.permute.xlu0 %666
      %668 = vrot.lane.b32.xlu0 %v656, 16
      %v669 = vpop.permute.xlu0 %668
      %vm670 = vcmp.lt.s32.totalorder %v662, 16
      %v671 = vsel %vm670, %v667, %v669
      %v672 = vsel %vm670, %v669, %v667
      %673 = vrot.lane.b32.xlu0 %v655, 15
      %v674 = vpop.permute.xlu0 %673
      %675 = vrot.lane.b32.xlu0 %v656, 15
      %v676 = vpop.permute.xlu0 %675
      %vm677 = vcmp.lt.s32.totalorder %v662, 15
      %v678 = vsel %vm677, %v674, %v676
      %v679 = vsel %vm677, %v676, %v674
      %680 = vrot.lane.b32.xlu0 %v655, 1
      %v681 = vpop.permute.xlu0 %680
      %682 = vrot.lane.b32.xlu0 %v656, 1
      %v683 = vpop.permute.xlu0 %682
      %vm684 = vcmp.lt.s32.totalorder %v662, 1
      %v685 = vsel %vm684, %v681, %v683
      %v686 = vsel %vm684, %v683, %v681
      %687 = vrot.lane.b32.xlu0 %v655, 127
      %v688 = vpop.permute.xlu0 %687
      %689 = vrot.lane.b32.xlu0 %v656, 127
      %v690 = vpop.permute.xlu0 %689
      %vm691 = vcmp.lt.s32.totalorder %v662, 127
      %v692 = vsel %vm691, %v688, %v690
      %v693 = vsel %vm691, %v690, %v688
      %694 = vrot.lane.b32.xlu0 %v655, 113
      %v695 = vpop.permute.xlu0 %694
      %696 = vrot.lane.b32.xlu0 %v656, 113
      %v697 = vpop.permute.xlu0 %696
      %vm698 = vcmp.lt.s32.totalorder %v662, 113
      %v699 = vsel %vm698, %v695, %v697
      %v700 = vsel %vm698, %v697, %v695
      %701 = vrot.lane.b32.xlu0 %v655, 112
      %v702 = vpop.permute.xlu0 %701
      %703 = vrot.lane.b32.xlu0 %v656, 112
      %v704 = vpop.permute.xlu0 %703
      %vm705 = vcmp.lt.s32.totalorder %v662, 112
      %v706 = vsel %vm705, %v702, %v704
      %v707 = vsel %vm705, %v704, %v702
      %708 = vrot.lane.b32.xlu0 %v655, 111
      %v709 = vpop.permute.xlu0 %708
      %710 = vrot.lane.b32.xlu0 %v656, 111
      %v711 = vpop.permute.xlu0 %710
      %vm712 = vcmp.lt.s32.totalorder %v662, 111
      %v713 = vsel %vm712, %v709, %v711
      %v714 = vsel %vm712, %v711, %v709
      %v715 = vmul.f32 %v665, %v333
      %v716 = vmul.f32 %v664, %v334
      %v717 = vmul.f32 %v672, %v335
      %v718 = vmul.f32 %v671, %v336
      %v719 = vmul.f32 %v679, %v337
      %v720 = vmul.f32 %v678, %v338
      %v721 = vmul.f32 %v686, %v339
      %v722 = vmul.f32 %v685, %v340
      %v723 = vmul.f32 %v655, %v341
      %v724 = vmul.f32 %v656, %v342
      %v725 = vmul.f32 %v692, %v343
      %v726 = vmul.f32 %v693, %v344
      %v727 = vmul.f32 %v699, %v345
      %v728 = vmul.f32 %v700, %v346
      %v729 = vmul.f32 %v706, %v347
      %v730 = vmul.f32 %v707, %v348
      %v731 = vmul.f32 %v713, %v349
      %v732 = vmul.f32 %v714, %v350
      %vm733 = vcmask 588800
      %v735 = vsel %vm733, %v332, 0
      %737 = vmatprep.subr.mxu0 %v716
      %738 = vmatpush1.msra.mxu0 %v715
      %739 = vmatprep.subr.mxu0 %v718
      %740 = vmatpush1.msra.mxu0 %v717
      %741 = vmatprep.subr.mxu0 %v720
      %742 = vmatpush1.msra.mxu0 %v719
      %743 = vmatprep.subr.mxu0 %v722
      %744 = vmatpush1.msra.mxu0 %v721
      %745 = vmatprep.subr.mxu0 %v724
      %746 = vmatpush1.msra.mxu0 %v723
      %747 = vmatprep.subr.mxu0 %v726
      %748 = vmatpush1.msra.mxu0 %v725
      %749 = vmatprep.subr.mxu0 %v728
      %750 = vmatpush1.msra.mxu0 %v727
      %751 = vmatprep.subr.mxu0 %v730
      %752 = vmatpush1.msra.mxu0 %v729
      %753 = vmatprep.subr.mxu0 %v732
      %754 = vmatpush1.msra.mxu0 %v731
      %755 = vmatprep.subr.mxu0 0.0
      %756 = vmatpush1.msra.mxu0 0.0
      %757 = vmatprep.subr.mxu0 0.0
      %758 = vmatpush1.msra.mxu0 0.0
      %759 = vmatprep.subr.mxu0 0.0
      %760 = vmatpush1.msra.mxu0 0.0
      %761 = vmatprep.subr.mxu0 0.0
      %762 = vmatpush1.msra.mxu0 0.0
      %763 = vmatprep.subr.mxu0 0.0
      %764 = vmatpush1.msra.mxu0 0.0
      %765 = vmatprep.subr.mxu0 0.0
      %766 = vmatpush1.msra.mxu0 0.0
      %767 = vmatprep.subr.mxu0 0.0
      %768 = vmatpush1.msra.mxu0 0.0
      %769 = vmatprep.subr.mxu0 0.0
      %770 = vmatpush1.msra.mxu0 0.0
      %771 = vmatprep.subr.mxu0 0.0
      %772 = vmatpush1.msra.mxu0 0.0
      %773 = vmatprep.subr.mxu0 0.0
      %774 = vmatpush1.msra.mxu0 0.0
      %775 = vmatprep.subr.mxu0 0.0
      %776 = vmatpush1.msra.mxu0 0.0
      %777 = vmatprep.subr.mxu0 0.0
      %778 = vmatpush1.msra.mxu0 0.0
      %779 = vmatprep.subr.mxu0 0.0
      %780 = vmatpush1.msra.mxu0 0.0
      %781 = vmatprep.subr.mxu0 0.0
      %782 = vmatpush1.msra.mxu0 0.0
      %783 = vmatprep.subr.mxu0 0.0
      %784 = vmatpush1.msra.mxu0 0.0
      %785 = vmatprep.subr.mxu0 0.0
      %786 = vmatpush1.msra.mxu0 0.0
      %787 = vmatprep.subr.mxu0 0.0
      %788 = vmatpush1.msra.mxu0 0.0
      %789 = vmatprep.subr.mxu0 0.0
      %790 = vmatpush1.msra.mxu0 0.0
      %791 = vmatprep.subr.mxu0 0.0
      %792 = vmatpush1.msra.mxu0 0.0
      %793 = vmatprep.subr.mxu0 0.0
      %794 = vmatpush1.msra.mxu0 0.0
      %795 = vmatprep.subr.mxu0 0.0
      %796 = vmatpush1.msra.mxu0 0.0
      %797 = vmatprep.subr.mxu0 0.0
      %798 = vmatpush1.msra.mxu0 0.0
      %799 = vmatprep.subr.mxu0 0.0
      %800 = vmatpush1.msra.mxu0 0.0
      %801 = vmatprep.mubr.f32.mxu0 0.0
      %802 = vmatmul.mubr.f32.gmra.mrb[0].mxu0 %v735
      %v803 = vpop.f32.mrb[0].mxu0
      %v804 = vadd.f32 0.0, %v803
      %v805 = vpop.f32.mrb[0].mxu0
      %v806 = vadd.f32 0.0, %v805
      %807 = vdwg.mxu0
      %v808 = vadd.f32 %v804, %v806
      %809 = vadd.xlane.f32.xlu0 %v808
      %v810 = vpop.xlane.xlu0 %809
      %v811 = vmul.f32 %v810, %v543
      %v812 = vsub.f32 %v804, %v811
      %v813 = vsub.f32 %v806, %v811
      %v814 = vmul.f32 %v812, %v812
      %v815 = vmul.f32 %v813, %v813
      %v816 = vadd.f32 %v814, %v815
      %817 = vadd.xlane.f32.xlu0 %v816
      %v818 = vpop.xlane.xlu0 %817
      %v819 = vmul.f32 %v818, %v543
      %v820 = vadd.f32 %v819, 1e-05
      %v821 = vrsqrt.pop %v820
      %v822 = vmul.f32 %v812, %v821
      %v823 = vmul.f32 %v813, %v821
      %v824 = vadd.f32 %v822, %v655
      %v825 = vadd.f32 %v823, %v656
      %vm826 = vcmp.gt.f32.partialorder %v824, 0.0
      %vm827 = vcmp.gt.f32.partialorder %v825, 0.0
      %v828 = vmul.f32 %v824, 0.2
      %v829 = vmul.f32 %v825, 0.2
      %v830 = vsel %vm826, %v824, %v828
      %v831 = vsel %vm827, %v825, %v829
      %832 = vst [vmem:[%s325] sm:$0xff] %v830
      %833 = vst [vmem:[%s325 + $0x8] sm:$0xff] %v831
      %p834 = scmp.lt.s32.totalorder %s19, 1
      %s835 = scalar_select %p834, %s19, 1
      %s836 = smul.addr %s835, 2
      %s837 = smul.addr %s836, 8
      %s838 = scalar_lea.vmem %s8, %s837
      // Predicated region
      $region53: #{upblock_pallas.1} parent=51 // pred_check
        %p839 = pneg %p215
      $region54: #{upblock_pallas.1} parent=51 // pred_check_branch
        %841 = sbr.rel (%p839) target = $region56
      $region55: #{upblock_pallas.1} parent=51 // pred_region
        _
      $region56: #{upblock_pallas.1} parent=51 // pred_fallthru
        _
    $region52: #{upblock_pallas.1} parent=5 // pred_fallthru
      _
    %p842 = scmp.le.s32.totalorder 2, %s14
    // Predicated region
    $region57: #{upblock_pallas.1} parent=5 // pred_check
      %p843 = pneg %p842
    $region58: #{upblock_pallas.1} parent=5 // pred_check_branch
      %845 = sbr.rel (%p843) target = $region60
    $region59: #{upblock_pallas.1} parent=5 // pred_region
      %s846 = ssub.s32 %s14, 2
      // Predicated region
      $region61: #{upblock_pallas.1} parent=59 // pred_check
        %p847 = pneg %p221
      $region62: #{upblock_pallas.1} parent=59 // pred_check_branch
        %849 = sbr.rel (%p847) target = $region64
      $region63: #{upblock_pallas.1} parent=59 // pred_region
        %p850 = scmp.lt.s32.totalorder %s20, 1
        %s851 = scalar_select %p850, %s20, 1
        %s852 = smul.addr %s851, 2
        %s853 = smul.addr %s852, 8
        %s854 = scalar_lea.vmem %s8, %s853
      $region64: #{upblock_pallas.1} parent=59 // pred_fallthru
        _
    $region60: #{upblock_pallas.1} parent=5 // pred_fallthru
      _
  $region6: #{upblock_pallas.1} parent=0 // loop_footer
    %s18 = sadd.s32 1, %s14
  $region7: #{upblock_pallas.1} parent=0 // loop_footer_branch
    %13 = sbr.rel target = $region3
  $region8: #{upblock_pallas.1} parent=0 // loop_exit
    _

</llo_original>
